<compile_context>
chip_gen: v7x
topology: tpu7x:2x2x1
jax: 0.10.0
libtpu: 0.0.40
codegen_flags: <defaults>
</compile_context>

<pallas_src>
import functools

import jax
import jax.numpy as jnp
from jax import lax
from jax.experimental import pallas as pl
from jax.experimental.pallas import tpu as pltpu

LN_EPS = 1e-5  # PyTorch nn.LayerNorm default


def _round_up(x, m):
    return (x + m - 1) // m * m


def _normadd_kernel(x_ref, params_ref, w_ref, o_ref, ln_ref, *, d_valid, n_cols):
    """One (row-tile, W-column-tile) grid step.

    x_ref:      (tm, d_pad)  input row tile (full feature width)
    params_ref: (8, d_pad)   row 0 = gamma, row 1 = beta, row 2 = bias (f32)
    w_ref:      (d_pad, tn)  column slab of the Linear weight (MXU dtype)
    o_ref:      (tm, tn)     output tile
    ln_ref:     (tm, d_pad)  VMEM scratch: LayerNorm(x) in the MXU dtype
    """
    j = pl.program_id(1)

    # LayerNorm once per row tile; subsequent column steps reuse the scratch.
    @pl.when(j == 0)
    def _():
        x = x_ref[...].astype(jnp.float32)
        inv_d = 1.0 / d_valid
        # Padded feature lanes of x are zero, so sum(x) and sum(x*x) are
        # already sums over the valid lanes only -> no iota/mask pass.
        mean = jnp.sum(x, axis=-1, keepdims=True) * inv_d
        ex2 = jnp.sum(x * x, axis=-1, keepdims=True) * inv_d
        var = jnp.maximum(ex2 - mean * mean, 0.0)
        inv = lax.rsqrt(var + LN_EPS)
        gamma = params_ref[0:1, :].astype(jnp.float32)
        beta = params_ref[1:2, :].astype(jnp.float32)
        # gamma/beta are zero on padded lanes, so ln is exactly zero there and
        # (with zero-padded W rows) contributes nothing to the matmul.
        ln_ref[...] = ((x - mean) * inv * gamma + beta).astype(ln_ref.dtype)

    # Sublayer Linear(D, D) column slab on the MXU; f32 accumulation.
    y = jnp.dot(ln_ref[...], w_ref[...], preferred_element_type=jnp.float32)

    tn = o_ref.shape[1]
    if n_cols == 1:
        bias = params_ref[2:3, :].astype(jnp.float32)
        x_col = x_ref[...].astype(jnp.float32)
    else:
        col0 = pl.multiple_of(j * tn, 128)
        bias = params_ref[2:3, pl.ds(col0, tn)].astype(jnp.float32)
        x_col = x_ref[:, pl.ds(col0, tn)].astype(jnp.float32)

    # TODO(synk): training-mode dropout (pltpu.prng_seed / prng_random_bits
    # keyed off pl.program_id) not implemented; inference dropout = identity.
    o_ref[...] = (x_col + (y + bias)).astype(o_ref.dtype)


def _vmem_bytes(tm, tn, d_pad, x_item, o_item, mxu_item):
    """Explicit VMEM estimate for one pipelined grid step."""
    return (2 * tm * d_pad * x_item       # x row tile, double-buffered
            + 2 * tm * tn * o_item        # output tile, double-buffered
            + 2 * d_pad * tn * mxu_item   # W column slab, double-buffered
            + 2 * 8 * d_pad * 4           # fused gamma/beta/bias
            + tm * d_pad * mxu_item       # LN scratch
            + 3 * tm * d_pad * 4          # f32 LN temporaries
            + tm * tn * 4)                # f32 matmul accumulator


def _pick_tiles(rows, d_pad, sub, row_tile, x_item, o_item, mxu_item, budget):
    """Choose (tm, tn): big row tiles, >=2 row steps when free, W slab fits."""
    rows_sub = _round_up(max(rows, 1), sub)
    if rows_sub <= row_tile:
        half = rows_sub // 2
        # Prefer >=2 row steps (v7x megacore) when it costs no extra padding.
        tm = half if (half >= sub and half % sub == 0) else rows_sub
    else:
        tm = _round_up(row_tile, sub)

    while True:
        # Largest W column slab (multiple of 128, dividing d_pad) that fits.
        n = 1
        tn = d_pad
        while True:
            if d_pad % n == 0 and (d_pad // n) % 128 == 0:
                tn = d_pad // n
                if tn == 128 or _vmem_bytes(tm, tn, d_pad, x_item, o_item,
                                            mxu_item) <= budget:
                    break
            n += 1
        if tm <= sub or _vmem_bytes(tm, tn, d_pad, x_item, o_item,
                                    mxu_item) <= budget:
            return tm, tn
        tm = max(sub, _round_up(tm // 2, sub))


def norm_add(x, gamma, beta, w, b, *, row_tile=512, mxu_dtype=None):
    """NormAdd forward: x + Linear(LayerNorm(x)), inference dropout.

    x: (B, S, D); gamma/beta/b: (D,); w: (D, D) with y = ln @ w + b.
    mxu_dtype: dtype fed to the MXU (default bf16 when w is f32, else w.dtype).
    """
    B, S, D = x.shape
    rows = B * S
    orig_dtype = x.dtype

    if mxu_dtype is None:
        mxu_dtype = jnp.bfloat16 if w.dtype == jnp.float32 else w.dtype
    mxu_dtype = jnp.dtype(mxu_dtype)

    d_pad = _round_up(D, 128)                # lane-dense features / MXU lanes
    x_item = jnp.dtype(orig_dtype).itemsize
    sub = 8 * max(1, 4 // x_item)            # sublane multiple: 8/16/32

    try:
        vmem_cap = int(pltpu.get_tpu_info().vmem_capacity_bytes)
    except Exception:
        vmem_cap = 64 * 1024 * 1024          # conservative (v7x per-TC VMEM)

    budget = max(vmem_cap - (16 << 20), 16 << 20)
    tm, tn = _pick_tiles(rows, d_pad, sub, row_tile, x_item, x_item,
                         mxu_dtype.itemsize, budget)
    rows_pad = _round_up(rows, tm)
    n_rows = rows_pad // tm
    n_cols = d_pad // tn

    # --- operand prep (skip HBM pad round trips whenever possible) ---
    x2 = x.reshape(rows, D)
    if rows_pad != rows or d_pad != D:
        x2 = jnp.pad(x2, ((0, rows_pad - rows), (0, d_pad - D)))

    w2 = w.astype(mxu_dtype)                 # single cast; halves W footprint
    if d_pad != D:
        w2 = jnp.pad(w2, ((0, d_pad - D), (0, d_pad - D)))

    # Fused gamma/beta/bias: one (8, d_pad) array -> one DMA, one pipeline slot.
    params = jnp.zeros((8, d_pad), jnp.float32)
    params = params.at[0, :D].set(gamma.astype(jnp.float32))
    params = params.at[1, :D].set(beta.astype(jnp.float32))
    params = params.at[2, :D].set(b.astype(jnp.float32))

    vmem_est = _vmem_bytes(tm, tn, d_pad, x_item, x_item, mxu_dtype.itemsize)
    vmem_limit = int(min(max(int(vmem_est * 1.5), 32 << 20),
                         vmem_cap - (8 << 20)))

    cost = pl.CostEstimate(
        flops=2 * rows_pad * d_pad * d_pad + 10 * rows_pad * d_pad,
        transcendentals=rows_pad,                          # one rsqrt per row
        bytes_accessed=(2 * rows_pad * d_pad * x_item      # x in + out
                        + d_pad * d_pad * mxu_dtype.itemsize),
    )

    kernel = functools.partial(_normadd_kernel, d_valid=D, n_cols=n_cols)

    out2 = pl.pallas_call(
        kernel,
        out_shape=jax.ShapeDtypeStruct((rows_pad, d_pad), orig_dtype),
        grid=(n_rows, n_cols),
        in_specs=[
            pl.BlockSpec((tm, d_pad), lambda i, j: (i, 0)),    # x row tile
            pl.BlockSpec((8, d_pad), lambda i, j: (0, 0)),     # gamma/beta/bias
            pl.BlockSpec((d_pad, tn), lambda i, j: (0, j)),    # W column slab
        ],
        out_specs=pl.BlockSpec((tm, tn), lambda i, j: (i, j)),
        scratch_shapes=[pltpu.VMEM((tm, d_pad), mxu_dtype)],   # LN cache
        compiler_params=pltpu.CompilerParams(
            dimension_semantics=("parallel", "arbitrary"),
            vmem_limit_bytes=vmem_limit,
        ),
        cost_estimate=cost,
    )(x2, params, w2)

    if rows_pad != rows or d_pad != D:
        out2 = out2[:rows, :D]
    return out2.reshape(B, S, D)


def _reference(x, gamma, beta, w, b):
    xf = x.astype(jnp.float32)
    mean = jnp.mean(xf, axis=-1, keepdims=True)
    var = jnp.mean((xf - mean) ** 2, axis=-1, keepdims=True)
    ln = (xf - mean) / jnp.sqrt(var + LN_EPS) * gamma + beta
    y = ln @ w.astype(jnp.float32) + b
    return (xf + y).astype(x.dtype)


if __name__ == "__main__":
    B, S, D = 2, 8, 32  # batch=2, seq=8, input_dim=32

    key = jax.random.PRNGKey(0)
    kx, kw, kb = jax.random.split(key, 3)

    x = jax.random.normal(kx, (B, S, D), dtype=jnp.float32)

    # LayerNorm params (PyTorch defaults: gamma=1, beta=0).
    gamma = jnp.ones((D,), jnp.float32)
    beta = jnp.zeros((D,), jnp.float32)

    # Sublayer Linear(D, D) params (y = ln @ W + b).
    bound = 1.0 / (D ** 0.5)
    w = jax.random.uniform(kw, (D, D), jnp.float32, -bound, bound)
    b = jax.random.uniform(kb, (D,), jnp.float32, -bound, bound)

    ref = _reference(x, gamma, beta, w, b)

    # Exact-precision path (f32 MXU operands): matches the module semantics.
    out_f32 = jax.block_until_ready(
        norm_add(x, gamma, beta, w, b, mxu_dtype=jnp.float32))
    assert out_f32.shape == (B, S, D)
    assert jnp.allclose(out_f32, ref, atol=1e-4, rtol=1e-4), "f32 path mismatch"

    # Default fast path: bf16 MXU operands, f32 accumulation.
    out = jax.block_until_ready(norm_add(x, gamma, beta, w, b))
    assert out.shape == (B, S, D)
    assert jnp.allclose(out, ref, atol=3e-2, rtol=3e-2), "bf16 path mismatch"

    print("KERNEL_OK")
</pallas_src>

<mosaic_0001>
module attributes {stable_mosaic.version = 11 : i64} {
  func.func @_normadd_kernel(%arg0: i32, %arg1: i32, %arg2: memref<8x128xf32, #tpu.memory_space<vmem>>, %arg3: memref<8x128xf32, #tpu.memory_space<vmem>>, %arg4: memref<128x128xf32, #tpu.memory_space<vmem>>, %arg5: memref<8x128xf32, #tpu.memory_space<vmem>>, %arg6: memref<8x128xf32, #tpu.memory_space<vmem>>) attributes {dimension_semantics = [#tpu.dimension_semantics<parallel>, #tpu.dimension_semantics<arbitrary>], iteration_bounds = array<i64: 2, 1>, scalar_prefetch = 0 : i64, scratch_operands = 1 : i64, tpu.core_type = #tpu.core_type<tc>, window_params = [{transform_indices = @transform_0, window_bounds = array<i64: 8, 128>}, {pipeline_mode = #tpu.pipeline_mode<synchronous>, transform_indices = @transform_1, window_bounds = array<i64: 8, 128>}, {transform_indices = @transform_2, window_bounds = array<i64: 128, 128>}, {transform_indices = @transform_3, window_bounds = array<i64: 8, 128>}]} {
    %c0_i32 = arith.constant 0 : i32
    %0 = arith.cmpi eq, %arg1, %c0_i32 : i32
    %1 = arith.extui %0 : i1 to i32
    %c0_i32_0 = arith.constant 0 : i32
    %2 = arith.cmpi ne, %1, %c0_i32_0 : i32
    scf.if %2 {
      %c0_9 = arith.constant 0 : index
      %c0_10 = arith.constant 0 : index
      %12 = vector.load %arg2[%c0_9, %c0_10] : memref<8x128xf32, #tpu.memory_space<vmem>>, vector<8x128xf32>
      %cst_11 = arith.constant dense<0.000000e+00> : vector<8xf32>
      %13 = vector.multi_reduction <add>, %12, %cst_11 [1] : vector<8x128xf32> to vector<8xf32>
      %14 = vector.shape_cast %13 : vector<8xf32> to vector<8x1xf32>
      %cst_12 = arith.constant 3.125000e-02 : f32
      %15 = vector.broadcast %cst_12 : f32 to vector<8x1xf32>
      %16 = arith.mulf %14, %15 : vector<8x1xf32>
      %17 = arith.mulf %12, %12 : vector<8x128xf32>
      %cst_13 = arith.constant dense<0.000000e+00> : vector<8xf32>
      %18 = vector.multi_reduction <add>, %17, %cst_13 [1] : vector<8x128xf32> to vector<8xf32>
      %19 = vector.shape_cast %18 : vector<8xf32> to vector<8x1xf32>
      %cst_14 = arith.constant 3.125000e-02 : f32
      %20 = vector.broadcast %cst_14 : f32 to vector<8x1xf32>
      %21 = arith.mulf %19, %20 : vector<8x1xf32>
      %22 = arith.mulf %16, %16 : vector<8x1xf32>
      %23 = arith.subf %21, %22 : vector<8x1xf32>
      %cst_15 = arith.constant 0.000000e+00 : f32
      %24 = vector.broadcast %cst_15 : f32 to vector<8x1xf32>
      %25 = arith.maximumf %23, %24 : vector<8x1xf32>
      %cst_16 = arith.constant 9.99999974E-6 : f32
      %26 = vector.broadcast %cst_16 : f32 to vector<8x1xf32>
      %27 = arith.addf %25, %26 : vector<8x1xf32>
      %28 = math.rsqrt %27 : vector<8x1xf32>
      %c0_17 = arith.constant 0 : index
      %c0_18 = arith.constant 0 : index
      %29 = vector.load %arg3[%c0_17, %c0_18] : memref<8x128xf32, #tpu.memory_space<vmem>>, vector<1x128xf32>
      %c1 = arith.constant 1 : index
      %c0_19 = arith.constant 0 : index
      %30 = vector.load %arg3[%c1, %c0_19] : memref<8x128xf32, #tpu.memory_space<vmem>>, vector<1x128xf32>
      %31 = vector.broadcast %16 : vector<8x1xf32> to vector<8x128xf32>
      %32 = arith.subf %12, %31 : vector<8x128xf32>
      %33 = vector.broadcast %28 : vector<8x1xf32> to vector<8x128xf32>
      %34 = arith.mulf %32, %33 : vector<8x128xf32>
      %35 = vector.broadcast %29 : vector<1x128xf32> to vector<8x128xf32>
      %36 = arith.mulf %34, %35 : vector<8x128xf32>
      %37 = vector.broadcast %30 : vector<1x128xf32> to vector<8x128xf32>
      %38 = arith.addf %36, %37 : vector<8x128xf32>
      %c0_20 = arith.constant 0 : index
      %c0_21 = arith.constant 0 : index
      %39 = vector.load %arg6[%c0_20, %c0_21] : memref<8x128xf32, #tpu.memory_space<vmem>>, vector<8x128xf32>
      tpu.vector_store %arg6[%c0_20, %c0_21], %38 {strides = array<i32>} : memref<8x128xf32, #tpu.memory_space<vmem>>, vector<8x128xf32>,
    } else {
    }
    %c0 = arith.constant 0 : index
    %c0_1 = arith.constant 0 : index
    %3 = vector.load %arg6[%c0, %c0_1] : memref<8x128xf32, #tpu.memory_space<vmem>>, vector<8x128xf32>
    %c0_2 = arith.constant 0 : index
    %c0_3 = arith.constant 0 : index
    %4 = vector.load %arg4[%c0_2, %c0_3] : memref<128x128xf32, #tpu.memory_space<vmem>>, vector<128x128xf32>
    %cst = arith.constant dense<0.000000e+00> : vector<8x128xf32>
    %5 = tpu.matmul %3, %4, %cst {dimension_numbers = #tpu.dot_dimension_numbers<[1], [0], [0], [1], [0, 0, 1, 1], [], []>} : vector<8x128xf32>, vector<128x128xf32>, vector<8x128xf32> -> vector<8x128xf32>
    %c2 = arith.constant 2 : index
    %c0_4 = arith.constant 0 : index
    %6 = vector.load %arg3[%c2, %c0_4] : memref<8x128xf32, #tpu.memory_space<vmem>>, vector<1x128xf32>
    %c0_5 = arith.constant 0 : index
    %c0_6 = arith.constant 0 : index
    %7 = vector.load %arg2[%c0_5, %c0_6] : memref<8x128xf32, #tpu.memory_space<vmem>>, vector<8x128xf32>
    %8 = vector.broadcast %6 : vector<1x128xf32> to vector<8x128xf32>
    %9 = arith.addf %5, %8 : vector<8x128xf32>
    %10 = arith.addf %7, %9 : vector<8x128xf32>
    %c0_7 = arith.constant 0 : index
    %c0_8 = arith.constant 0 : index
    %11 = vector.load %arg5[%c0_7, %c0_8] : memref<8x128xf32, #tpu.memory_space<vmem>>, vector<8x128xf32>
    tpu.vector_store %arg5[%c0_7, %c0_8], %10 {strides = array<i32>} : memref<8x128xf32, #tpu.memory_space<vmem>>, vector<8x128xf32>,
    return
  }
  func.func @transform_0(%arg0: i32, %arg1: i32) -> (i32, i32) {
    %c0_i32 = arith.constant 0 : i32
    %c0_i32_0 = arith.constant 0 : i32
    return %arg0, %c0_i32 : i32, i32
  }
  func.func @transform_1(%arg0: i32, %arg1: i32) -> (i32, i32) {
    %c0_i32 = arith.constant 0 : i32
    %c0_i32_0 = arith.constant 0 : i32
    %c0_i32_1 = arith.constant 0 : i32
    return %c0_i32, %c0_i32_0 : i32, i32
  }
  func.func @transform_2(%arg0: i32, %arg1: i32) -> (i32, i32) {
    %c0_i32 = arith.constant 0 : i32
    %c0_i32_0 = arith.constant 0 : i32
    return %c0_i32, %arg1 : i32, i32
  }
  func.func @transform_3(%arg0: i32, %arg1: i32) -> (i32, i32) {
    %c0_i32 = arith.constant 0 : i32
    return %arg0, %arg1 : i32, i32
  }
}

</mosaic_0001>

<llo_original>
// kernel: tpu_custom_call.1
$region0: #{tpu_custom_call.1}
  #allocation0 [shape = 'u32[]', space=smem, size = 0x4, offset = 0x4, fixed_abs, tag = 'smem constant byte address 0x4 - core index']
  #allocation1 [shape = 'u32[144,128]{1,0:T(1,128)}', space=vmem, size = 0x12000, scoped, tag = 'internal scratch']
  #allocation2 [shape = 'f32[8,128]{1,0:T(8,128)}', space=vmem, size = 0x1000, scoped, tag = 'scratch operand']
  %s0 = inlined_call_operand.hbm [shape: f32[16,128], index: 0, kind: input, shape index: {}]
  %s1 = inlined_call_operand.hbm [shape: f32[8,128], index: 1, kind: input, shape index: {}]
  %s2 = inlined_call_operand.hbm [shape: f32[128,128], index: 2, kind: input, shape index: {}]
  %s3 = inlined_call_operand.hbm [shape: f32[16,128], index: 3, kind: output, shape index: {}]
  %s4 = sld [smem:[#allocation0]]
  $region61: #{tpu_custom_call.1} parent=0
    _
  %s6 = ssub.s32 1, %s4
  %s7 = scalar_select 0, %s6, %s4
  $region1: #{tpu_custom_call.1} parent=0
    #allocation3 [shape = 'u8[8192]{0}', space=vmem, size = 0x2000, scoped, tag = 'input window, operand 0']
    #allocation4 [shape = 's32[2]{0}', space=sflag, size = 0x8, scoped, tag = 'scoped memory for tpu_custom_call.1']
    #allocation5 [shape = 's32[2]{0}', space=sflag, size = 0x8, scoped, tag = 'scoped memory for tpu_custom_call.1']
    #allocation6 [shape = 'u8[4096]{0}', space=vmem, size = 0x1000, scoped, tag = 'input window, operand 1, single buffered']
    #allocation7 [shape = 's32[1]{0}', space=sflag, size = 0x4, scoped, tag = 'scoped memory for tpu_custom_call.1']
    #allocation8 [shape = 'u8[65536]{0}', space=vmem, size = 0x10000, scoped, tag = 'input window, operand 2, single buffered']
    #allocation9 [shape = 'u8[8192]{0}', space=vmem, size = 0x2000, scoped, tag = 'output window, operand 0']
    %8 = vsyncpa [#allocation4], 0
    %s9 = scalar_lea.sflag [#allocation4], 1
    %10 = vsyncpa %s9, 0
    %11 = vsyncpa [#allocation7], 0
    %12 = vsyncpa [#allocation5], 0
    %s13 = scalar_lea.sflag [#allocation5], 1
    %14 = vsyncpa %s13, 0
    loop: start=0, step=1, limit=4
    $region2: #{tpu_custom_call.1} parent=1 // loop_pre_header
      _
    $region3: #{tpu_custom_call.1} parent=1 // loop_header
      %s16 = sphi 0, %s20
      %p17 = scmp.ge.s32.totalorder %s16, 4
      %s23 = sphi 0, %s35
      %s24 = sphi 0, %s31
      %s25 = sphi 0, %s23
      %s26 = sphi 0, %s24
      %s27 = sphi 0, %s25
      %s28 = sphi 0, %s26
      %s38 = sphi 0, %s40
      %s41 = sphi 0, %s38
      %s42 = sphi 0, %s41
      %s58 = sphi 0, %s42
      %s62 = sphi 0, %s62
      %s64 = sphi 0, %s62
      %s65 = sphi 0, %s64
      %s79 = sphi 0, %s65
      %s85 = sphi 0, %s87
      %s88 = sphi 0, %s85
      %s89 = sphi 0, %s88
      %s105 = sphi 0, %s89
      %s113 = sphi 0, %s115
      %s116 = sphi 0, %s113
      %s117 = sphi 0, %s116
      %s133 = sphi 0, %s117
    $region4: #{tpu_custom_call.1} parent=1 // loop_header_branch
      %19 = sbr.rel (%p17) target = $region8
    $region5: #{tpu_custom_call.1} parent=1 // loop_body
      %s21 = ssub.s32 %s16, 1
      %s22 = ssub.s32 %s16, 2
      %s29 = sadd.s32 1, %s24
      %p30 = scmp.ge.s32.totalorder %s29, 1
      %s31 = scalar_select %p30, 0, %s29
      %s32 = sadd.s32 1, %s23
      %s33 = scalar_select %p30, %s32, %s23
      %p34 = scmp.ge.s32.totalorder %s33, 2
      %s35 = scalar_select %p34, 0, %s33
      %s36 = ssub.s32 %s23, %s35
      %p37 = scmp.eq.s32.totalorder %s36, 0
      %s39 = sadd.s32 %s38, 1
      %s40 = scalar_select %p37, %s38, %s39
      %p43 = pneg %p37
      %p44 = scmp.eq.s32.totalorder %s16, 1
      %p45 = por %p43, %p44
      %p46 = scmp.ne.s32.totalorder %s38, %s41
      %p47 = scmp.eq.s32.totalorder %s16, 0
      %p48 = por %p46, %p47
      %p49 = scmp.ne.s32.totalorder %s38, %s41
      %p50 = scmp.eq.s32.totalorder %s21, 1
      %p51 = por %p49, %p50
      %p52 = scmp.ne.s32.totalorder %s41, %s42
      %p53 = scmp.eq.s32.totalorder %s21, 0
      %p54 = por %p52, %p53
      %p55 = scmp.ne.s32.totalorder %s41, %s42
      %p56 = scmp.eq.s32.totalorder %s22, 1
      %p57 = por %p55, %p56
      %p59 = scmp.ne.s32.totalorder %s42, %s58
      %p60 = scmp.eq.s32.totalorder %s22, 0
      %p61 = por %p59, %p60
      %s63 = sadd.s32 %s62, 1
      %p66 = scmp.eq.s32.totalorder %s16, 1
      %p67 = scmp.ne.s32.totalorder %s62, %s64
      %p68 = scmp.eq.s32.totalorder %s16, 0
      %p69 = por %p67, %p68
      %p70 = scmp.ne.s32.totalorder %s62, %s64
      %p71 = scmp.eq.s32.totalorder %s21, 1
      %p72 = por %p70, %p71
      %p73 = scmp.ne.s32.totalorder %s64, %s65
      %p74 = scmp.eq.s32.totalorder %s21, 0
      %p75 = por %p73, %p74
      %p76 = scmp.ne.s32.totalorder %s64, %s65
      %p77 = scmp.eq.s32.totalorder %s22, 1
      %p78 = por %p76, %p77
      %p80 = scmp.ne.s32.totalorder %s65, %s79
      %p81 = scmp.eq.s32.totalorder %s22, 0
      %p82 = por %p80, %p81
      %s83 = ssub.s32 %s24, %s31
      %p84 = scmp.eq.s32.totalorder %s83, 0
      %s86 = sadd.s32 %s85, 1
      %s87 = scalar_select %p84, %s85, %s86
      %p90 = pneg %p84
      %p91 = scmp.eq.s32.totalorder %s16, 1
      %p92 = por %p90, %p91
      %p93 = scmp.ne.s32.totalorder %s85, %s88
      %p94 = scmp.eq.s32.totalorder %s16, 0
      %p95 = por %p93, %p94
      %p96 = scmp.ne.s32.totalorder %s85, %s88
      %p97 = scmp.eq.s32.totalorder %s21, 1
      %p98 = por %p96, %p97
      %p99 = scmp.ne.s32.totalorder %s88, %s89
      %p100 = scmp.eq.s32.totalorder %s21, 0
      %p101 = por %p99, %p100
      %p102 = scmp.ne.s32.totalorder %s88, %s89
      %p103 = scmp.eq.s32.totalorder %s22, 1
      %p104 = por %p102, %p103
      %p106 = scmp.ne.s32.totalorder %s89, %s105
      %p107 = scmp.eq.s32.totalorder %s22, 0
      %p108 = por %p106, %p107
      %s109 = ssub.s32 %s23, %s35
      %s110 = ssub.s32 %s24, %s31
      %s111 = sor.u32 %s109, %s110
      %p112 = scmp.eq.s32.totalorder %s111, 0
      %s114 = sadd.s32 %s113, 1
      %s115 = scalar_select %p112, %s113, %s114
      %p118 = pneg %p112
      %p119 = scmp.eq.s32.totalorder %s16, 1
      %p120 = por %p118, %p119
      %p121 = scmp.ne.s32.totalorder %s113, %s116
      %p122 = scmp.eq.s32.totalorder %s16, 0
      %p123 = por %p121, %p122
      %p124 = scmp.ne.s32.totalorder %s113, %s116
      %p125 = scmp.eq.s32.totalorder %s21, 1
      %p126 = por %p124, %p125
      %p127 = scmp.ne.s32.totalorder %s116, %s117
      %p128 = scmp.eq.s32.totalorder %s21, 0
      %p129 = por %p127, %p128
      %p130 = scmp.ne.s32.totalorder %s116, %s117
      %p131 = scmp.eq.s32.totalorder %s22, 1
      %p132 = por %p130, %p131
      %p134 = scmp.ne.s32.totalorder %s117, %s133
      %p135 = scmp.eq.s32.totalorder %s22, 0
      %p136 = por %p134, %p135
      %p137 = scmp.le.s32.totalorder 1, %s16
      %p138 = scmp.lt.s32.totalorder %s16, 3
      %p139 = pnand %p137, %p138
      %p140 = pneg %p139
      // Predicated region
      $region9: #{tpu_custom_call.1} parent=5 // pred_check
        _
      $region10: #{tpu_custom_call.1} parent=5 // pred_check_branch
        %142 = sbr.rel (%p139) target = $region12
      $region11: #{tpu_custom_call.1} parent=5 // pred_region
        %s143 = ssub.s32 %s16, 1
        // Predicated region
        $region13: #{tpu_custom_call.1} parent=11 // pred_check
          %p144 = pneg %p75
        $region14: #{tpu_custom_call.1} parent=11 // pred_check_branch
          %146 = sbr.rel (%p144) target = $region16
        $region15: #{tpu_custom_call.1} parent=11 // pred_region
          %s148 = ssub.s32 128, 128
          %149 = vsyncadd [#allocation7], %s148
          %s151 = sshll.u32 [#allocation6], 4
          %s152 = int_to_ptr.vmem [resolvable:$true] %s151
          %154 = dma.hbm_to_vmem [thread:$0]  %s1, 128, %s152, [#allocation7]
        $region16: #{tpu_custom_call.1} parent=11 // pred_fallthru
          _
        // Predicated region
        $region17: #{tpu_custom_call.1} parent=11 // pred_check
          %p155 = pneg %p101
        $region18: #{tpu_custom_call.1} parent=11 // pred_check_branch
          %157 = sbr.rel (%p155) target = $region20
        $region19: #{tpu_custom_call.1} parent=11 // pred_region
          %s159 = ssub.s32 2048, 2048
          %160 = vsyncadd [#allocation7], %s159
          %s161 = smul.addr %s26, 128
          %s162 = scalar_lea.hbm %s2, %s161
          %s163 = sshll.u32 [#allocation8], 4
          %s164 = int_to_ptr.vmem [resolvable:$true] %s163
          %169 = dma.hbm_to_vmem [thread:$0]  %s162, 2048, %s164, [#allocation7], 128, 128, 8
        $region20: #{tpu_custom_call.1} parent=11 // pred_fallthru
          _
      $region12: #{tpu_custom_call.1} parent=5 // pred_fallthru
        _
      %p170 = scmp.lt.s32.totalorder %s16, 2
      // Predicated region
      $region21: #{tpu_custom_call.1} parent=5 // pred_check
        %p171 = pneg %p170
      $region22: #{tpu_custom_call.1} parent=5 // pred_check_branch
        %173 = sbr.rel (%p171) target = $region24
      $region23: #{tpu_custom_call.1} parent=5 // pred_region
        // Predicated region
        $region25: #{tpu_custom_call.1} parent=23 // pred_check
          %p174 = pneg %p48
        $region26: #{tpu_custom_call.1} parent=23 // pred_check_branch
          %176 = sbr.rel (%p174) target = $region28
        $region27: #{tpu_custom_call.1} parent=23 // pred_region
          %s177 = sand.u32 %s38, 1
          %s178 = scalar_lea.sflag [#allocation4], %s177
          %s179 = sand.u32 %s38, 1
          %s180 = smul.addr %s179, 8
          %s181 = scalar_lea.vmem [#allocation3], %s180
          %s183 = ssub.s32 128, 128
          %184 = vsyncadd %s178, %s183
          %s185 = smul.addr %s23, 128
          %s186 = scalar_lea.hbm %s0, %s185
          %s188 = sshll.u32 %s181, 4
          %s189 = int_to_ptr.vmem [resolvable:$true] %s188
          %191 = dma.hbm_to_vmem [thread:$0]  %s186, 128, %s189, %s178
        $region28: #{tpu_custom_call.1} parent=23 // pred_fallthru
          _
      $region24: #{tpu_custom_call.1} parent=5 // pred_fallthru
        _
      %p192 = scmp.le.s32.totalorder 1, %s16
      %p193 = scmp.lt.s32.totalorder %s16, 3
      %p194 = pnand %p192, %p193
      %p195 = pneg %p194
      // Predicated region
      $region29: #{tpu_custom_call.1} parent=5 // pred_check
        _
      $region30: #{tpu_custom_call.1} parent=5 // pred_check_branch
        %197 = sbr.rel (%p194) target = $region32
      $region31: #{tpu_custom_call.1} parent=5 // pred_region
        %s198 = ssub.s32 %s16, 1
        %s199 = sand.u32 %s41, 1
        %s200 = scalar_lea.sflag [#allocation4], %s199
        %s201 = sand.u32 %s41, 1
        %s202 = smul.addr %s201, 8
        %s203 = scalar_lea.vmem [#allocation3], %s202
        // Predicated region
        $region33: #{tpu_custom_call.1} parent=31 // pred_check
          %p204 = pneg %p54
        $region34: #{tpu_custom_call.1} parent=31 // pred_check_branch
          %206 = sbr.rel (%p204) target = $region36
        $region35: #{tpu_custom_call.1} parent=31 // pred_region
          %207 = dma.done %s200, 128
        $region36: #{tpu_custom_call.1} parent=31 // pred_fallthru
          _
        // Predicated region
        $region37: #{tpu_custom_call.1} parent=31 // pred_check
          %p208 = pneg %p75
        $region38: #{tpu_custom_call.1} parent=31 // pred_check_branch
          %210 = sbr.rel (%p208) target = $region40
        $region39: #{tpu_custom_call.1} parent=31 // pred_region
          %211 = dma.done [#allocation7], 128
        $region40: #{tpu_custom_call.1} parent=31 // pred_fallthru
          _
        // Predicated region
        $region41: #{tpu_custom_call.1} parent=31 // pred_check
          %p212 = pneg %p101
        $region42: #{tpu_custom_call.1} parent=31 // pred_check_branch
          %214 = sbr.rel (%p212) target = $region44
        $region43: #{tpu_custom_call.1} parent=31 // pred_region
          %215 = dma.done [#allocation7], 2048
        $region44: #{tpu_custom_call.1} parent=31 // pred_fallthru
          _
        %s216 = sand.u32 %s41, 1
        %s217 = scalar_lea.sflag [#allocation4], %s216
        %s218 = sand.u32 %s41, 1
        %s219 = smul.addr %s218, 8
        %s220 = scalar_lea.vmem [#allocation3], %s219
        %p221 = pneg %p54
        %p222 = pneg %p51
        %p223 = pneg %p75
        %p224 = pneg %p72
        %p225 = pneg %p101
        %p226 = pneg %p98
        %p227 = pneg %p129
        %p228 = pneg %p126
        %s229 = sand.u32 %s116, 1
        %s230 = scalar_lea.sflag [#allocation5], %s229
        %s231 = sand.u32 %s116, 1
        %s232 = smul.addr %s231, 8
        %s233 = scalar_lea.vmem [#allocation9], %s232
        %p234 = scmp.eq.s32.totalorder %s26, 0
        // Predicated region
        $region45: #{tpu_custom_call.1} parent=31 // pred_check
          %p235 = pneg %p234
        $region46: #{tpu_custom_call.1} parent=31 // pred_check_branch
          %237 = sbr.rel (%p235) target = $region48
        $region47: #{tpu_custom_call.1} parent=31 // pred_region
          %v238 = vld [vmem:[%s203] sm:$0xff]
          %239 = vadd.xlane.f32.xlu0 %v238
          %v240 = vpop.xlane.xlu0 %239
          %v241 = vmul.f32 %v240, 0.03125
          %v242 = vmul.f32 %v238, %v238
          %243 = vadd.xlane.f32.xlu0 %v242
          %v244 = vpop.xlane.xlu0 %243
          %v245 = vmul.f32 %v244, 0.03125
          %v246 = vmul.f32 %v241, %v241
          %v247 = vsub.f32 %v245, %v246
          %v248 = vmax.f32 %v247, 0.0
          %v249 = vadd.f32 %v248, 1e-05
          %v250 = vrsqrt.pop %v249
          %v251 = vld [vmem:[#allocation6] sm:$0x1]
          %v252 = vld [vmem:[#allocation6 + $0x1] sm:$0x1]
          %v253 = vsub.f32 %v238, %v241
          %v254 = vmul.f32 %v253, %v250
          %v255 = vlaneseq
          %v256 = vshrl.u32 %v255, 7
          %v257 = vsub.s32 0, %v256
          %v258 = vrot.slane %v251, %v257
          %v259 = vmul.f32 %v254, %v258
          %v260 = vlaneseq
          %v261 = vshrl.u32 %v260, 7
          %v262 = vsub.s32 0, %v261
          %v263 = vrot.slane %v252, %v262
          %v264 = vadd.f32 %v259, %v263
          %265 = vst [vmem:[#allocation2] sm:$0xff] %v264
        $region48: #{tpu_custom_call.1} parent=31 // pred_fallthru
          _
        %v266 = vld [vmem:[#allocation2] sm:$0xff]
        %v267 = vld [vmem:[#allocation8] sm:$0xff]
        %v268 = vld [vmem:[#allocation8 + $0x8] sm:$0xff]
        %v269 = vld [vmem:[#allocation8 + $0x10] sm:$0xff]
        %v270 = vld [vmem:[#allocation8 + $0x18] sm:$0xff]
        %v271 = vld [vmem:[#allocation8 + $0x20] sm:$0xff]
        %v272 = vld [vmem:[#allocation8 + $0x28] sm:$0xff]
        %v273 = vld [vmem:[#allocation8 + $0x30] sm:$0xff]
        %v274 = vld [vmem:[#allocation8 + $0x38] sm:$0xff]
        %v275 = vld [vmem:[#allocation8 + $0x40] sm:$0xff]
        %v276 = vld [vmem:[#allocation8 + $0x48] sm:$0xff]
        %v277 = vld [vmem:[#allocation8 + $0x50] sm:$0xff]
        %v278 = vld [vmem:[#allocation8 + $0x58] sm:$0xff]
        %v279 = vld [vmem:[#allocation8 + $0x60] sm:$0xff]
        %v280 = vld [vmem:[#allocation8 + $0x68] sm:$0xff]
        %v281 = vld [vmem:[#allocation8 + $0x70] sm:$0xff]
        %v282 = vld [vmem:[#allocation8 + $0x78] sm:$0xff]
        %v283 = vld [vmem:[#allocation6 + $0x2] sm:$0x1]
        %v284 = vld [vmem:[%s203] sm:$0xff]
        %v285 = vlaneseq
        %v286 = vshrl.u32 %v285, 7
        %v287 = vsub.s32 0, %v286
        %v288 = vrot.slane %v283, %v287
        %289 = vmatprep.subr.mxu0 0.0
        %290 = vmatpush1.msra.mxu0 %v267
        %291 = vmatprep.subr.mxu0 0.0
        %292 = vmatpush1.msra.mxu0 %v268
        %293 = vmatprep.subr.mxu0 0.0
        %294 = vmatpush1.msra.mxu0 %v269
        %295 = vmatprep.subr.mxu0 0.0
        %296 = vmatpush1.msra.mxu0 %v270
        %297 = vmatprep.subr.mxu0 0.0
        %298 = vmatpush1.msra.mxu0 %v271
        %299 = vmatprep.subr.mxu0 0.0
        %300 = vmatpush1.msra.mxu0 %v272
        %301 = vmatprep.subr.mxu0 0.0
        %302 = vmatpush1.msra.mxu0 %v273
        %303 = vmatprep.subr.mxu0 0.0
        %304 = vmatpush1.msra.mxu0 %v274
        %305 = vmatprep.subr.mxu0 0.0
        %306 = vmatpush1.msra.mxu0 %v275
        %307 = vmatprep.subr.mxu0 0.0
        %308 = vmatpush1.msra.mxu0 %v276
        %309 = vmatprep.subr.mxu0 0.0
        %310 = vmatpush1.msra.mxu0 %v277
        %311 = vmatprep.subr.mxu0 0.0
        %312 = vmatpush1.msra.mxu0 %v278
        %313 = vmatprep.subr.mxu0 0.0
        %314 = vmatpush1.msra.mxu0 %v279
        %315 = vmatprep.subr.mxu0 0.0
        %316 = vmatpush1.msra.mxu0 %v280
        %317 = vmatprep.subr.mxu0 0.0
        %318 = vmatpush1.msra.mxu0 %v281
        %319 = vmatprep.subr.mxu0 0.0
        %320 = vmatpush1.msra.mxu0 %v282
        %321 = vmatprep.subr.mxu0 0.0
        %322 = vmatpush1.msra.mxu0 0.0
        %323 = vmatprep.subr.mxu0 0.0
        %324 = vmatpush1.msra.mxu0 0.0
        %325 = vmatprep.subr.mxu0 0.0
        %326 = vmatpush1.msra.mxu0 0.0
        %327 = vmatprep.subr.mxu0 0.0
        %328 = vmatpush1.msra.mxu0 0.0
        %329 = vmatprep.subr.mxu0 0.0
        %330 = vmatpush1.msra.mxu0 0.0
        %331 = vmatprep.subr.mxu0 0.0
        %332 = vmatpush1.msra.mxu0 0.0
        %333 = vmatprep.subr.mxu0 0.0
        %334 = vmatpush1.msra.mxu0 0.0
        %335 = vmatprep.subr.mxu0 0.0
        %336 = vmatpush1.msra.mxu0 0.0
        %337 = vmatprep.subr.mxu0 0.0
        %338 = vmatpush1.msra.mxu0 0.0
        %339 = vmatprep.subr.mxu0 0.0
        %340 = vmatpush1.msra.mxu0 0.0
        %341 = vmatprep.subr.mxu0 0.0
        %342 = vmatpush1.msra.mxu0 0.0
        %343 = vmatprep.subr.mxu0 0.0
        %344 = vmatpush1.msra.mxu0 0.0
        %345 = vmatprep.subr.mxu0 0.0
        %346 = vmatpush1.msra.mxu0 0.0
        %347 = vmatprep.subr.mxu0 0.0
        %348 = vmatpush1.msra.mxu0 0.0
        %349 = vmatprep.subr.mxu0 0.0
        %350 = vmatpush1.msra.mxu0 0.0
        %351 = vmatprep.subr.mxu0 0.0
        %352 = vmatpush1.msra.mxu0 0.0
        %353 = vmatprep.mubr.f32.mxu0 0.0
        %354 = vmatmul.mubr.f32.gmra.mrb[0].mxu0 %v266
        %v355 = vpop.f32.mrb[0].mxu0
        %v356 = vadd.f32 %v288, %v355
        %v357 = vpop.f32.mrb[0].mxu0
        %358 = vdwg.mxu0
        %v359 = vadd.f32 %v284, %v356
        %360 = vst [vmem:[%s233] sm:$0xff] %v359
        %s361 = sand.u32 %s116, 1
        %s362 = scalar_lea.sflag [#allocation5], %s361
        %s363 = sand.u32 %s116, 1
        %s364 = smul.addr %s363, 8
        %s365 = scalar_lea.vmem [#allocation9], %s364
        // Predicated region
        $region49: #{tpu_custom_call.1} parent=31 // pred_check
          %p366 = pneg %p126
        $region50: #{tpu_custom_call.1} parent=31 // pred_check_branch
          %368 = sbr.rel (%p366) target = $region52
        $region51: #{tpu_custom_call.1} parent=31 // pred_region
          %s370 = ssub.s32 128, 128
          %371 = vsyncadd %s362, %s370
          %s372 = sadd.s32 %s26, %s25
          %s373 = smul.addr %s372, 128
          %s374 = scalar_lea.hbm %s3, %s373
          %s376 = sshll.u32 %s365, 4
          %s377 = int_to_ptr.vmem [resolvable:$true] %s376
          %379 = dma.vmem_to_hbm [thread:$0]  %s377, 128, %s374, %s362
        $region52: #{tpu_custom_call.1} parent=31 // pred_fallthru
          _
      $region32: #{tpu_custom_call.1} parent=5 // pred_fallthru
        _
      %p380 = scmp.le.s32.totalorder 2, %s16
      // Predicated region
      $region53: #{tpu_custom_call.1} parent=5 // pred_check
        %p381 = pneg %p380
      $region54: #{tpu_custom_call.1} parent=5 // pred_check_branch
        %383 = sbr.rel (%p381) target = $region56
      $region55: #{tpu_custom_call.1} parent=5 // pred_region
        %s384 = ssub.s32 %s16, 2
        // Predicated region
        $region57: #{tpu_custom_call.1} parent=55 // pred_check
          %p385 = pneg %p132
        $region58: #{tpu_custom_call.1} parent=55 // pred_check_branch
          %387 = sbr.rel (%p385) target = $region60
        $region59: #{tpu_custom_call.1} parent=55 // pred_region
          %s388 = sand.u32 %s117, 1
          %s389 = scalar_lea.sflag [#allocation5], %s388
          %s390 = sand.u32 %s117, 1
          %s391 = smul.addr %s390, 8
          %s392 = scalar_lea.vmem [#allocation9], %s391
          %393 = dma.done %s389, 128
        $region60: #{tpu_custom_call.1} parent=55 // pred_fallthru
          _
      $region56: #{tpu_custom_call.1} parent=5 // pred_fallthru
        _
    $region6: #{tpu_custom_call.1} parent=1 // loop_footer
      %s20 = sadd.s32 1, %s16
    $region7: #{tpu_custom_call.1} parent=1 // loop_footer_branch
      %15 = sbr.rel target = $region3
    $region8: #{tpu_custom_call.1} parent=1 // loop_exit
      _
    %394 = vsyncpa [#allocation4], 1
    %s395 = scalar_lea.sflag [#allocation4], 1
    %396 = vsyncpa %s395, 1
    %397 = vsyncpa [#allocation7], 1
    %398 = vsyncpa [#allocation5], 1
    %s399 = scalar_lea.sflag [#allocation5], 1
    %400 = vsyncpa %s399, 1

</llo_original>
